<compile_context>
chip_gen: v7x
topology: tpu7x:2x2x1
jax: 0.10.0
libtpu: 0.0.40
codegen_flags: <defaults>
</compile_context>

<pallas_src>
import jax
import jax.numpy as jnp
from jax.experimental import pallas as pl
from jax.experimental.pallas import tpu as pltpu


_GATHER_ROWS = 8                     # rows gathered per grid step (sublane-dense)
_RESIDENT_TABLE_MAX_BYTES = 2 << 20  # tables up to 2 MiB stay fully VMEM-resident
                                     # (could be raised to ~8 MiB on v7x)


def _gather_kernel(labels_ref, table_hbm, out_ref, buf, sems):
    """Manual-DMA row gather: 8 row DMAs HBM->VMEM scratch, one dense store.

    labels_ref : (B_pad,) int32 in SMEM (scalar prefetch)
    table_hbm  : (V, Hp) embedding table, left in HBM (memory_space=pl.ANY)
    out_ref    : (8, Hp) output block in VMEM
    buf        : (8, Hp) VMEM scratch
    sems       : (8,) DMA semaphores
    """
    base = pl.program_id(0) * _GATHER_ROWS
    copies = []
    for g in range(_GATHER_ROWS):
        idx = labels_ref[base + g]
        copies.append(
            pltpu.make_async_copy(
                table_hbm.at[pl.ds(idx, 1), :],
                buf.at[pl.ds(g, 1), :],
                sems.at[g],
            )
        )
    for c in copies:   # issue all 8 row DMAs so they are in flight concurrently
        c.start()
    for c in copies:
        c.wait()
    out_ref[...] = buf[...]


def _resident_kernel(labels_ref, table_ref, out_ref):
    """Table fully VMEM-resident: dynamic-sublane row reads into a dense block."""
    base = pl.program_id(0) * _GATHER_ROWS
    for g in range(_GATHER_ROWS):
        idx = labels_ref[base + g]
        out_ref[pl.ds(g, 1), :] = table_ref[pl.ds(idx, 1), :]


def label_embed_pallas(labels, table, hidden_size=None, table_resident=None):
    """Row-gather embedding lookup.

    labels: (B,) integer labels.
    table:  (V, Hp) embedding table whose last dim is already padded to a
            multiple of 128 (LabelEmbedder pads once at init).
    hidden_size: true (unpadded) embedding width; output is (B, hidden_size).
    table_resident: force the VMEM-resident path (True) or the manual-DMA
            gather path (False); None picks by table size.
    """
    B = labels.shape[0]
    V, Hp = table.shape
    if Hp % 128 != 0:
        raise ValueError(
            f"embedding table width must be a multiple of 128 (pad at init); got {Hp}"
        )
    H = Hp if hidden_size is None else hidden_size

    # Clamp to a valid row: row-gather DMAs have no runtime OOB check on TPU.
    labels_i32 = jnp.clip(labels.astype(jnp.int32), 0, V - 1)

    # Pad batch to a multiple of the per-step row count so the output block
    # is always (8, Hp)-dense; padded rows read row 0 and are sliced off.
    G = _GATHER_ROWS
    grid_b = pl.cdiv(B, G)
    b_pad = grid_b * G
    if b_pad != B:
        labels_i32 = jnp.pad(labels_i32, (0, b_pad - B))

    if table_resident is None:
        table_resident = V * Hp * table.dtype.itemsize <= _RESIDENT_TABLE_MAX_BYTES

    out_shape = jax.ShapeDtypeStruct((b_pad, Hp), table.dtype)
    out_spec = pl.BlockSpec((G, Hp), lambda i, labels: (i, 0))
    compiler_params = pltpu.CompilerParams(dimension_semantics=("parallel",))

    if table_resident:
        out = pl.pallas_call(
            _resident_kernel,
            out_shape=out_shape,
            grid_spec=pltpu.PrefetchScalarGridSpec(
                num_scalar_prefetch=1,
                grid=(grid_b,),
                # Full-extent block, same index every step -> one table DMA.
                in_specs=[pl.BlockSpec((V, Hp), lambda i, labels: (0, 0))],
                out_specs=out_spec,
            ),
            compiler_params=compiler_params,
        )(labels_i32, table)
    else:
        out = pl.pallas_call(
            _gather_kernel,
            out_shape=out_shape,
            grid_spec=pltpu.PrefetchScalarGridSpec(
                num_scalar_prefetch=1,
                grid=(grid_b,),
                in_specs=[pl.BlockSpec(memory_space=pl.ANY)],
                out_specs=out_spec,
                scratch_shapes=[
                    pltpu.VMEM((G, Hp), table.dtype),
                    pltpu.SemaphoreType.DMA((G,)),
                ],
            ),
            compiler_params=compiler_params,
        )(labels_i32, table)

    if b_pad != B:
        out = out[:B]
    if H != Hp:
        out = out[:, :H]
    return out


class LabelEmbedder:
    """JAX/Pallas port of the PyTorch LabelEmbedder (DiT classifier-free guidance)."""

    def __init__(self, num_classes, hidden_size, dropout_prob, key):
        self.num_classes = num_classes
        self.hidden_size = hidden_size
        self.dropout_prob = dropout_prob
        use_cfg_embedding = int(dropout_prob > 0)
        # nn.Embedding default init: N(0, 1)
        table = jax.random.normal(
            key, (num_classes + use_cfg_embedding, hidden_size), jnp.float32
        )
        # Pad the hidden dim to a lane multiple ONCE here (never per call).
        hp = ((hidden_size + 127) // 128) * 128
        if hp != hidden_size:
            table = jnp.pad(table, ((0, 0), (0, hp - hidden_size)))
        self.embedding_table = table  # (num_classes + cfg, Hp), lane-padded

    @property
    def embedding_table_unpadded(self):
        return self.embedding_table[:, : self.hidden_size]

    def token_drop(self, labels, rng=None, force_drop_ids=None):
        # TODO(synk): label-dropout mask stays in plain JAX (tiny (B,) compute);
        # fusing it into the kernel via pltpu.prng_* is possible but marginal.
        if force_drop_ids is None:
            if rng is None:
                raise ValueError("rng is required for random label dropout")
            drop_ids = jax.random.uniform(rng, (labels.shape[0],)) < self.dropout_prob
        else:
            drop_ids = force_drop_ids == 1
        return jnp.where(drop_ids, self.num_classes, labels)

    def __call__(self, labels, train, rng=None, force_drop_ids=None):
        use_dropout = self.dropout_prob > 0
        if force_drop_ids is not None and not use_dropout:
            # No CFG-null row exists in the table when dropout_prob == 0;
            # PyTorch would raise an out-of-range indexing error here, so fail
            # loudly instead of silently clamping to a real class.
            raise ValueError("force_drop_ids requires dropout_prob > 0")
        if (train and use_dropout) or (force_drop_ids is not None):
            labels = self.token_drop(labels, rng, force_drop_ids)
        return label_embed_pallas(labels, self.embedding_table, self.hidden_size)


if __name__ == "__main__":
    key = jax.random.PRNGKey(0)
    k_table, k_labels, k_drop = jax.random.split(key, 3)

    num_classes, hidden_size, dropout_prob = 10, 128, 0.1
    B = 8

    embedder = LabelEmbedder(num_classes, hidden_size, dropout_prob, k_table)
    labels = jax.random.randint(k_labels, (B,), 0, num_classes, dtype=jnp.int32)

    # Training path (random CFG dropout).
    out = jax.block_until_ready(embedder(labels, train=True, rng=k_drop))
    dropped = embedder.token_drop(labels, k_drop)  # same key -> same mask
    ref_table = embedder.embedding_table_unpadded
    assert out.shape == (B, hidden_size), out.shape
    assert out.dtype == jnp.float32
    assert jnp.allclose(out, ref_table[dropped], atol=1e-6), "train path mismatch"

    # Eval path (no dropout).
    out_eval = jax.block_until_ready(embedder(labels, train=False))
    assert jnp.allclose(out_eval, ref_table[labels], atol=1e-6), "eval path mismatch"

    # force_drop_ids path.
    force = jnp.array([1, 0, 1, 0, 0, 0, 0, 1], dtype=jnp.int32)
    out_force = jax.block_until_ready(
        embedder(labels, train=False, force_drop_ids=force)
    )
    forced_labels = jnp.where(force == 1, num_classes, labels)
    assert jnp.allclose(out_force, ref_table[forced_labels], atol=1e-6), "force path mismatch"

    # Exercise BOTH kernel paths explicitly (VMEM-resident and manual-DMA
    # gather), including a non-multiple-of-8 batch and a hidden size that
    # needs lane padding.
    emb2 = LabelEmbedder(num_classes, 96, dropout_prob, k_table)
    labels2 = jax.random.randint(k_labels, (5,), 0, num_classes, dtype=jnp.int32)
    ref2 = emb2.embedding_table_unpadded[labels2]
    for resident in (True, False):
        o2 = jax.block_until_ready(
            label_embed_pallas(
                labels2, emb2.embedding_table, emb2.hidden_size, table_resident=resident
            )
        )
        assert o2.shape == (5, 96), o2.shape
        assert jnp.allclose(o2, ref2, atol=1e-6), f"mismatch (resident={resident})"

    print("KERNEL_OK")
</pallas_src>

<mosaic_0001>
module attributes {stable_mosaic.version = 11 : i64} {
  func.func @_resident_kernel(%arg0: i32, %arg1: memref<8xi32, #tpu.memory_space<smem>>, %arg2: memref<11x128xf32, #tpu.memory_space<vmem>>, %arg3: memref<8x128xf32, #tpu.memory_space<vmem>>) attributes {dimension_semantics = [#tpu.dimension_semantics<parallel>], iteration_bounds = array<i64: 1>, scalar_prefetch = 1 : i64, scratch_operands = 0 : i64, tpu.core_type = #tpu.core_type<tc>, window_params = [{pipeline_mode = #tpu.pipeline_mode<synchronous>, transform_indices = @transform_0, window_bounds = array<i64: 11, 128>}, {transform_indices = @transform_1, window_bounds = array<i64: 8, 128>}]} {
    %c8_i32 = arith.constant 8 : i32
    %0 = arith.muli %arg0, %c8_i32 : i32
    %c0_i32 = arith.constant 0 : i32
    %1 = arith.addi %0, %c0_i32 : i32
    %2 = arith.index_cast %1 : i32 to index
    %3 = memref.load %arg1[%2] : memref<8xi32, #tpu.memory_space<smem>>
    %4 = arith.index_cast %3 : i32 to index
    %c0 = arith.constant 0 : index
    %5 = vector.load %arg2[%4, %c0] : memref<11x128xf32, #tpu.memory_space<vmem>>, vector<1x128xf32>
    %c0_0 = arith.constant 0 : index
    %c0_1 = arith.constant 0 : index
    %6 = vector.load %arg3[%c0_0, %c0_1] : memref<8x128xf32, #tpu.memory_space<vmem>>, vector<1x128xf32>
    tpu.vector_store %arg3[%c0_0, %c0_1], %5 {strides = array<i32>} : memref<8x128xf32, #tpu.memory_space<vmem>>, vector<1x128xf32>,
    %c1_i32 = arith.constant 1 : i32
    %7 = arith.addi %0, %c1_i32 : i32
    %8 = arith.index_cast %7 : i32 to index
    %9 = memref.load %arg1[%8] : memref<8xi32, #tpu.memory_space<smem>>
    %10 = arith.index_cast %9 : i32 to index
    %c0_2 = arith.constant 0 : index
    %11 = vector.load %arg2[%10, %c0_2] : memref<11x128xf32, #tpu.memory_space<vmem>>, vector<1x128xf32>
    %c1 = arith.constant 1 : index
    %c0_3 = arith.constant 0 : index
    %12 = vector.load %arg3[%c1, %c0_3] : memref<8x128xf32, #tpu.memory_space<vmem>>, vector<1x128xf32>
    tpu.vector_store %arg3[%c1, %c0_3], %11 {strides = array<i32>} : memref<8x128xf32, #tpu.memory_space<vmem>>, vector<1x128xf32>,
    %c2_i32 = arith.constant 2 : i32
    %13 = arith.addi %0, %c2_i32 : i32
    %14 = arith.index_cast %13 : i32 to index
    %15 = memref.load %arg1[%14] : memref<8xi32, #tpu.memory_space<smem>>
    %16 = arith.index_cast %15 : i32 to index
    %c0_4 = arith.constant 0 : index
    %17 = vector.load %arg2[%16, %c0_4] : memref<11x128xf32, #tpu.memory_space<vmem>>, vector<1x128xf32>
    %c2 = arith.constant 2 : index
    %c0_5 = arith.constant 0 : index
    %18 = vector.load %arg3[%c2, %c0_5] : memref<8x128xf32, #tpu.memory_space<vmem>>, vector<1x128xf32>
    tpu.vector_store %arg3[%c2, %c0_5], %17 {strides = array<i32>} : memref<8x128xf32, #tpu.memory_space<vmem>>, vector<1x128xf32>,
    %c3_i32 = arith.constant 3 : i32
    %19 = arith.addi %0, %c3_i32 : i32
    %20 = arith.index_cast %19 : i32 to index
    %21 = memref.load %arg1[%20] : memref<8xi32, #tpu.memory_space<smem>>
    %22 = arith.index_cast %21 : i32 to index
    %c0_6 = arith.constant 0 : index
    %23 = vector.load %arg2[%22, %c0_6] : memref<11x128xf32, #tpu.memory_space<vmem>>, vector<1x128xf32>
    %c3 = arith.constant 3 : index
    %c0_7 = arith.constant 0 : index
    %24 = vector.load %arg3[%c3, %c0_7] : memref<8x128xf32, #tpu.memory_space<vmem>>, vector<1x128xf32>
    tpu.vector_store %arg3[%c3, %c0_7], %23 {strides = array<i32>} : memref<8x128xf32, #tpu.memory_space<vmem>>, vector<1x128xf32>,
    %c4_i32 = arith.constant 4 : i32
    %25 = arith.addi %0, %c4_i32 : i32
    %26 = arith.index_cast %25 : i32 to index
    %27 = memref.load %arg1[%26] : memref<8xi32, #tpu.memory_space<smem>>
    %28 = arith.index_cast %27 : i32 to index
    %c0_8 = arith.constant 0 : index
    %29 = vector.load %arg2[%28, %c0_8] : memref<11x128xf32, #tpu.memory_space<vmem>>, vector<1x128xf32>
    %c4 = arith.constant 4 : index
    %c0_9 = arith.constant 0 : index
    %30 = vector.load %arg3[%c4, %c0_9] : memref<8x128xf32, #tpu.memory_space<vmem>>, vector<1x128xf32>
    tpu.vector_store %arg3[%c4, %c0_9], %29 {strides = array<i32>} : memref<8x128xf32, #tpu.memory_space<vmem>>, vector<1x128xf32>,
    %c5_i32 = arith.constant 5 : i32
    %31 = arith.addi %0, %c5_i32 : i32
    %32 = arith.index_cast %31 : i32 to index
    %33 = memref.load %arg1[%32] : memref<8xi32, #tpu.memory_space<smem>>
    %34 = arith.index_cast %33 : i32 to index
    %c0_10 = arith.constant 0 : index
    %35 = vector.load %arg2[%34, %c0_10] : memref<11x128xf32, #tpu.memory_space<vmem>>, vector<1x128xf32>
    %c5 = arith.constant 5 : index
    %c0_11 = arith.constant 0 : index
    %36 = vector.load %arg3[%c5, %c0_11] : memref<8x128xf32, #tpu.memory_space<vmem>>, vector<1x128xf32>
    tpu.vector_store %arg3[%c5, %c0_11], %35 {strides = array<i32>} : memref<8x128xf32, #tpu.memory_space<vmem>>, vector<1x128xf32>,
    %c6_i32 = arith.constant 6 : i32
    %37 = arith.addi %0, %c6_i32 : i32
    %38 = arith.index_cast %37 : i32 to index
    %39 = memref.load %arg1[%38] : memref<8xi32, #tpu.memory_space<smem>>
    %40 = arith.index_cast %39 : i32 to index
    %c0_12 = arith.constant 0 : index
    %41 = vector.load %arg2[%40, %c0_12] : memref<11x128xf32, #tpu.memory_space<vmem>>, vector<1x128xf32>
    %c6 = arith.constant 6 : index
    %c0_13 = arith.constant 0 : index
    %42 = vector.load %arg3[%c6, %c0_13] : memref<8x128xf32, #tpu.memory_space<vmem>>, vector<1x128xf32>
    tpu.vector_store %arg3[%c6, %c0_13], %41 {strides = array<i32>} : memref<8x128xf32, #tpu.memory_space<vmem>>, vector<1x128xf32>,
    %c7_i32 = arith.constant 7 : i32
    %43 = arith.addi %0, %c7_i32 : i32
    %44 = arith.index_cast %43 : i32 to index
    %45 = memref.load %arg1[%44] : memref<8xi32, #tpu.memory_space<smem>>
    %46 = arith.index_cast %45 : i32 to index
    %c0_14 = arith.constant 0 : index
    %47 = vector.load %arg2[%46, %c0_14] : memref<11x128xf32, #tpu.memory_space<vmem>>, vector<1x128xf32>
    %c7 = arith.constant 7 : index
    %c0_15 = arith.constant 0 : index
    %48 = vector.load %arg3[%c7, %c0_15] : memref<8x128xf32, #tpu.memory_space<vmem>>, vector<1x128xf32>
    tpu.vector_store %arg3[%c7, %c0_15], %47 {strides = array<i32>} : memref<8x128xf32, #tpu.memory_space<vmem>>, vector<1x128xf32>,
    return
  }
  func.func @transform_0(%arg0: i32, %arg1: memref<8xi32, #tpu.memory_space<smem>>) -> (i32, i32) {
    %c0_i32 = arith.constant 0 : i32
    %c0_i32_0 = arith.constant 0 : i32
    %c0_i32_1 = arith.constant 0 : i32
    return %c0_i32, %c0_i32_0 : i32, i32
  }
  func.func @transform_1(%arg0: i32, %arg1: memref<8xi32, #tpu.memory_space<smem>>) -> (i32, i32) {
    %c0_i32 = arith.constant 0 : i32
    %c0_i32_0 = arith.constant 0 : i32
    return %arg0, %c0_i32 : i32, i32
  }
}

</mosaic_0001>

<llo_original>
// kernel: tpu_custom_call.1
$region0: #{tpu_custom_call.1}
  #allocation0 [shape = 'u32[]', space=smem, size = 0x4, offset = 0x4, fixed_abs, tag = 'smem constant byte address 0x4 - core index']
  #allocation1 [shape = 'u32[144,128]{1,0:T(1,128)}', space=vmem, size = 0x12000, scoped, tag = 'internal scratch']
  #allocation2 [shape = 's32[1]{0}', space=sflag, size = 0x4, scoped, tag = 'scoped memory for tpu_custom_call.1']
  #allocation3 [shape = 'u8[512]{0}', space=smem, size = 0x200, scoped, tag = 'prefetched SMEM operand 0']
  %s0 = inlined_call_operand.hbm [shape: s32[8], index: 0, kind: input, shape index: {}]
  %s1 = inlined_call_operand.hbm [shape: f32[11,128], index: 1, kind: input, shape index: {}]
  %s2 = inlined_call_operand.hbm [shape: f32[8,128], index: 2, kind: output, shape index: {}]
  %s3 = sld [smem:[#allocation0]]
  $region18: #{tpu_custom_call.1} parent=0
    _
  %s5 = ssub.s32 1, %s3
  %s6 = scalar_select 0, %s5, %s3
  %8 = dma.hbm_to_smem %s0, 16, [#allocation3], [#allocation2]
  %9 = dma.done [#allocation2], 16
  %10 = sfence
  $region1: #{tpu_custom_call.1} parent=0
    #allocation4 [shape = 'u8[8192]{0}', space=vmem, size = 0x2000, scoped, tag = 'input window, operand 1, single buffered']
    #allocation5 [shape = 's32[1]{0}', space=sflag, size = 0x4, scoped, tag = 'scoped memory for tpu_custom_call.1']
    #allocation6 [shape = 's32[1]{0}', space=sflag, size = 0x4, scoped, tag = 'scoped memory for tpu_custom_call.1']
    #allocation7 [shape = 'u8[4096]{0}', space=vmem, size = 0x1000, scoped, tag = 'output window, operand 0, single buffered']
    %11 = vsyncpa [#allocation5], 0
    %12 = vsyncpa [#allocation6], 0
    // Predicated region
    $region2: #{tpu_custom_call.1} parent=1 // pred_check
      _
    $region3: #{tpu_custom_call.1} parent=1 // pred_check_branch
      %14 = sbr.rel (0) target = $region5
    $region4: #{tpu_custom_call.1} parent=1 // pred_region
      %s16 = ssub.s32 256, 256
      %17 = vsyncadd [#allocation5], %s16
      %s18 = sshll.u32 [#allocation4], 4
      %s19 = int_to_ptr.vmem [resolvable:$true] %s18
      %24 = dma.hbm_to_vmem [thread:$0]  %s1, 256, %s19, [#allocation5], 128, 128, 8
    $region5: #{tpu_custom_call.1} parent=1 // pred_fallthru
      _
    // Predicated region
    $region6: #{tpu_custom_call.1} parent=1 // pred_check
      _
    $region7: #{tpu_custom_call.1} parent=1 // pred_check_branch
      %26 = sbr.rel (0) target = $region9
    $region8: #{tpu_custom_call.1} parent=1 // pred_region
      %27 = dma.done [#allocation5], 256
    $region9: #{tpu_custom_call.1} parent=1 // pred_fallthru
      _
    %s28 = smul.u32 0, 8
    %s29 = sld [smem:[#allocation3 + %s28]]
    %s30 = scalar_lea.vmem [#allocation4], %s29
    %v31 = vld [vmem:[%s30] sm:$0x1]
    %32 = vst [vmem:[#allocation7] sm:$0x1] %v31
    %s33 = sadd.s32 %s28, 1
    %s34 = sld [smem:[#allocation3 + %s33]]
    %s35 = scalar_lea.vmem [#allocation4], %s34
    %v36 = vld [vmem:[%s35] sm:$0x1]
    %37 = vst [vmem:[#allocation7 + $0x1] sm:$0x1] %v36
    %s38 = sadd.s32 %s28, 2
    %s39 = sld [smem:[#allocation3 + %s38]]
    %s40 = scalar_lea.vmem [#allocation4], %s39
    %v41 = vld [vmem:[%s40] sm:$0x1]
    %42 = vst [vmem:[#allocation7 + $0x2] sm:$0x1] %v41
    %s43 = sadd.s32 %s28, 3
    %s44 = sld [smem:[#allocation3 + %s43]]
    %s45 = scalar_lea.vmem [#allocation4], %s44
    %v46 = vld [vmem:[%s45] sm:$0x1]
    %47 = vst [vmem:[#allocation7 + $0x3] sm:$0x1] %v46
    %s48 = sadd.s32 %s28, 4
    %s49 = sld [smem:[#allocation3 + %s48]]
    %s50 = scalar_lea.vmem [#allocation4], %s49
    %v51 = vld [vmem:[%s50] sm:$0x1]
    %52 = vst [vmem:[#allocation7 + $0x4] sm:$0x1] %v51
    %s53 = sadd.s32 %s28, 5
    %s54 = sld [smem:[#allocation3 + %s53]]
    %s55 = scalar_lea.vmem [#allocation4], %s54
    %v56 = vld [vmem:[%s55] sm:$0x1]
    %57 = vst [vmem:[#allocation7 + $0x5] sm:$0x1] %v56
    %s58 = sadd.s32 %s28, 6
    %s59 = sld [smem:[#allocation3 + %s58]]
    %s60 = scalar_lea.vmem [#allocation4], %s59
    %v61 = vld [vmem:[%s60] sm:$0x1]
    %62 = vst [vmem:[#allocation7 + $0x6] sm:$0x1] %v61
    %s63 = sadd.s32 %s28, 7
    %s64 = sld [smem:[#allocation3 + %s63]]
    %s65 = scalar_lea.vmem [#allocation4], %s64
    %v66 = vld [vmem:[%s65] sm:$0x1]
    %67 = vst [vmem:[#allocation7 + $0x7] sm:$0x1] %v66
    // Predicated region
    $region10: #{tpu_custom_call.1} parent=1 // pred_check
      _
    $region11: #{tpu_custom_call.1} parent=1 // pred_check_branch
      %69 = sbr.rel (0) target = $region13
    $region12: #{tpu_custom_call.1} parent=1 // pred_region
      %s71 = ssub.s32 128, 128
      %72 = vsyncadd [#allocation6], %s71
      %s74 = sshll.u32 [#allocation7], 4
      %s75 = int_to_ptr.vmem [resolvable:$true] %s74
      %77 = dma.vmem_to_hbm [thread:$0]  %s75, 128, %s2, [#allocation6]
    $region13: #{tpu_custom_call.1} parent=1 // pred_fallthru
      _
    // Predicated region
    $region14: #{tpu_custom_call.1} parent=1 // pred_check
      _
    $region15: #{tpu_custom_call.1} parent=1 // pred_check_branch
      %79 = sbr.rel (0) target = $region17
    $region16: #{tpu_custom_call.1} parent=1 // pred_region
      %80 = dma.done [#allocation6], 128
    $region17: #{tpu_custom_call.1} parent=1 // pred_fallthru
      _
    %81 = vsyncpa [#allocation5], 1
    %82 = vsyncpa [#allocation6], 1

</llo_original>
